<compile_context>
chip_gen: v6e
topology: v6e:2x2x1
jax: 0.10.0
libtpu: 0.0.40
codegen_flags: <defaults>
</compile_context>

<pallas_src>
import functools
import math

import jax
import jax.numpy as jnp
from jax.experimental import pallas as pl
from jax.experimental.pallas import tpu as pltpu

F_IN = 100          # logical input features of the Linear
F_PAD = 128         # lane-dense padded K dimension
D_PAD = 128         # lane-dense padded output dimension of the stored weight
TB_MAX = 512        # fixed batch tile for large batches (review: 512-1024)


# ---------------------------------------------------------------------------
# Pallas kernel: fused Linear + bias + Tanh
#   x_ref:  (TB, 100)   unpadded activation tile
#   w_ref:  (128, 128)  zero-padded W^T (resident in VMEM across grid steps)
#   b_ref:  (1, 128)    zero-padded bias
#   o_ref:  (TB, dim)   output tile written directly at the logical width
#   xpad:   (TB, 128)   VMEM scratch; lane-dense activation for a clean K=128
# ---------------------------------------------------------------------------
def linear_tanh_kernel(x_ref, w_ref, b_ref, o_ref, xpad_ref):
    tb = x_ref.shape[0]
    # Lane-pad the activation inside VMEM (zeros in lanes 100..127).  Done
    # every step (cheap VMEM stores) so it is safe under megacore sharding.
    xpad_ref[:, F_IN:] = jnp.zeros((tb, F_PAD - F_IN), jnp.float32)
    xpad_ref[:, :F_IN] = x_ref[...]
    y = jnp.dot(xpad_ref[...], w_ref[...], preferred_element_type=jnp.float32)
    z = jnp.tanh(y + b_ref[...])
    o_ref[...] = z[:, : o_ref.shape[-1]].astype(o_ref.dtype)


@functools.partial(jax.jit, static_argnames=("dim",))
def noode_linear_tanh(x0, w_pad, b_pad, *, dim):
    """x0: (B, 100) f32 -> tanh(x0 @ W.T + b): (B, dim) f32."""
    B = x0.shape[0]
    if B <= TB_MAX:
        # Single bounded tile; full-array block shapes are always legal, so no
        # row padding (and no surrounding XLA pad/slice ops) for small batches.
        TB, B_pad = B, B
    else:
        TB = TB_MAX
        B_pad = pl.cdiv(B, TB) * TB

    x_in = x0 if B_pad == B else jnp.pad(x0, ((0, B_pad - B), (0, 0)))
    grid = (B_pad // TB,)

    out = pl.pallas_call(
        linear_tanh_kernel,
        out_shape=jax.ShapeDtypeStruct((B_pad, dim), jnp.float32),
        grid=grid,
        in_specs=[
            pl.BlockSpec((TB, F_IN), lambda i: (i, 0)),
            # Weights / bias: same block every grid step -> VMEM-resident.
            pl.BlockSpec((F_PAD, D_PAD), lambda i: (0, 0)),
            pl.BlockSpec((1, D_PAD), lambda i: (0, 0)),
        ],
        out_specs=pl.BlockSpec((TB, dim), lambda i: (i, 0)),
        scratch_shapes=[pltpu.VMEM((TB, F_PAD), jnp.float32)],
        compiler_params=pltpu.CompilerParams(
            dimension_semantics=("parallel",),
        ),
        cost_estimate=pl.CostEstimate(
            flops=2 * B_pad * F_PAD * D_PAD,
            transcendentals=B_pad * D_PAD,
            bytes_accessed=4 * (B_pad * F_IN + F_PAD * D_PAD + D_PAD + B_pad * dim),
        ),
    )(x_in, w_pad, b_pad)
    return out if B_pad == B else out[:B]


# ---------------------------------------------------------------------------
# Fused fixed-step Euler rollout of the 2-state NOODE system (dim == 100):
#   x0' = tanh(x0 @ W.T + b),   x1' = x0
# One pallas_call, W/b resident in VMEM, time loop via lax.fori_loop.
# ---------------------------------------------------------------------------
def _euler_kernel(x0_ref, x1_ref, w_ref, b_ref, o0_ref, o1_ref,
                  x0p_ref, x1p_ref, *, n_steps, dt):
    b_rows = x0_ref.shape[0]
    zero_pad = jnp.zeros((b_rows, F_PAD - F_IN), jnp.float32)
    x0p_ref[:, F_IN:] = zero_pad
    x0p_ref[:, :F_IN] = x0_ref[...]
    x1p_ref[:, F_IN:] = zero_pad
    x1p_ref[:, :F_IN] = x1_ref[...]

    w = w_ref[...]
    bias = b_ref[...]

    def body(_, carry):
        s0, s1 = carry
        z = jnp.tanh(jnp.dot(s0, w, preferred_element_type=jnp.float32) + bias)
        return (s0 + dt * z, s1 + dt * s0)

    s0, s1 = jax.lax.fori_loop(0, n_steps, body, (x0p_ref[...], x1p_ref[...]))
    o0_ref[...] = s0[:, :F_IN]
    o1_ref[...] = s1[:, :F_IN]


@functools.partial(jax.jit, static_argnames=("n_steps", "dt"))
def noode_euler_fused(x0, x1, w_pad, b_pad, *, n_steps, dt):
    B, f = x0.shape
    assert f == F_IN, "fused rollout requires dim == 100 (state recurrence)"
    kernel = functools.partial(_euler_kernel, n_steps=n_steps, dt=dt)
    return pl.pallas_call(
        kernel,
        out_shape=(jax.ShapeDtypeStruct((B, F_IN), jnp.float32),
                   jax.ShapeDtypeStruct((B, F_IN), jnp.float32)),
        grid=(1,),
        in_specs=[
            pl.BlockSpec((B, F_IN), lambda i: (0, 0)),
            pl.BlockSpec((B, F_IN), lambda i: (0, 0)),
            pl.BlockSpec((F_PAD, D_PAD), lambda i: (0, 0)),
            pl.BlockSpec((1, D_PAD), lambda i: (0, 0)),
        ],
        out_specs=(pl.BlockSpec((B, F_IN), lambda i: (0, 0)),
                   pl.BlockSpec((B, F_IN), lambda i: (0, 0))),
        scratch_shapes=[pltpu.VMEM((B, F_PAD), jnp.float32),
                        pltpu.VMEM((B, F_PAD), jnp.float32)],
    )(x0, x1, w_pad, b_pad)


# ---------------------------------------------------------------------------
# NOODEFunc wrapper
# ---------------------------------------------------------------------------
class NOODEFuncPallas:
    def __init__(self, dim, key):
        self.dim = dim
        k_w, k_b = jax.random.split(key)

        # xavier_uniform_ with gain=sqrt(2): bound = gain*sqrt(6/(fan_in+fan_out))
        gain = math.sqrt(2.0)
        bound_w = gain * math.sqrt(6.0 / (F_IN + dim))
        # PyTorch stores weight as (dim, 100); we keep it transposed as (100, dim).
        w_t = jax.random.uniform(
            k_w, (F_IN, dim), jnp.float32, minval=-bound_w, maxval=bound_w
        )
        # nn.Linear default bias init: U(-1/sqrt(fan_in), 1/sqrt(fan_in))
        bound_b = 1.0 / math.sqrt(F_IN)
        b = jax.random.uniform(
            k_b, (dim,), jnp.float32, minval=-bound_b, maxval=bound_b
        )

        # Pre-pad parameters ONCE to lane-dense shapes (zero padding => padded
        # K lanes contribute 0 to the dot; padded output lanes are never read).
        w_pad = jnp.zeros((F_PAD, D_PAD), jnp.float32).at[:F_IN, :dim].set(w_t)
        b_pad = jnp.zeros((1, D_PAD), jnp.float32).at[0, :dim].set(b)

        self.w_t = w_t          # unpadded, for reference checks
        self.b = b
        self.w_pad = w_pad
        self.b_pad = b_pad

    def __call__(self, t, x):
        assert isinstance(x, tuple)
        z = noode_linear_tanh(x[0], self.w_pad, self.b_pad, dim=self.dim)
        return tuple(x[i - 1] if i else z for i in range(len(x)))


# ---------------------------------------------------------------------------
# main
# ---------------------------------------------------------------------------
if __name__ == "__main__":
    key = jax.random.PRNGKey(0)
    k_params, k_x0, k_x1, k_big, k_p100, k_e0, k_e1 = jax.random.split(key, 7)

    HI = jax.lax.Precision.HIGHEST  # exact f32 reference matmuls

    # ---- 1) Single forward eval at the module's shapes (spec semantics) ----
    dim, batch = 32, 8
    model = NOODEFuncPallas(dim, k_params)
    x0 = jax.random.normal(k_x0, (batch, F_IN), jnp.float32)
    x1 = jax.random.normal(k_x1, (batch, dim), jnp.float32)
    out = model(jnp.float32(0.0), (x0, x1))
    out = jax.tree_util.tree_map(jax.block_until_ready, out)

    ref_z = jnp.tanh(jnp.dot(x0, model.w_t, precision=HI) + model.b)
    assert out[0].shape == (batch, dim)
    assert out[1].shape == x0.shape
    assert jnp.allclose(out[0], ref_z, atol=1e-4, rtol=1e-4)
    assert jnp.array_equal(out[1], x0)

    # ---- 2) Batched-states streaming path (grid > 1, fixed TB=512) ----
    big_b = 1040  # not a multiple of 512 -> exercises row padding + cdiv grid
    xb = jax.random.normal(k_big, (big_b, F_IN), jnp.float32)
    zb = jax.block_until_ready(
        noode_linear_tanh(xb, model.w_pad, model.b_pad, dim=dim))
    ref_b = jnp.tanh(jnp.dot(xb, model.w_t, precision=HI) + model.b)
    assert zb.shape == (big_b, dim)
    assert jnp.allclose(zb, ref_b, atol=1e-4, rtol=1e-4)

    # ---- 3) Fused Euler rollout: many NOODEFunc evals in ONE pallas_call ----
    model100 = NOODEFuncPallas(F_IN, k_p100)       # dim == 100 state system
    e0 = jax.random.normal(k_e0, (batch, F_IN), jnp.float32)
    e1 = jax.random.normal(k_e1, (batch, F_IN), jnp.float32)
    n_steps, dt = 16, 0.05
    y0, y1 = noode_euler_fused(e0, e1, model100.w_pad, model100.b_pad,
                               n_steps=n_steps, dt=dt)
    y0 = jax.block_until_ready(y0)
    y1 = jax.block_until_ready(y1)

    r0, r1 = e0, e1
    for _ in range(n_steps):
        z = jnp.tanh(jnp.dot(r0, model100.w_t, precision=HI) + model100.b)
        r0, r1 = r0 + dt * z, r1 + dt * r0
    assert jnp.allclose(y0, r0, atol=1e-3, rtol=1e-3)
    assert jnp.allclose(y1, r1, atol=1e-3, rtol=1e-3)

    print("KERNEL_OK")
</pallas_src>

<mosaic_0001>
module attributes {stable_mosaic.version = 11 : i64} {
  func.func @linear_tanh_kernel(%arg0: i32, %arg1: memref<8x100xf32, #tpu.memory_space<vmem>>, %arg2: memref<128x128xf32, #tpu.memory_space<vmem>>, %arg3: memref<1x128xf32, #tpu.memory_space<vmem>>, %arg4: memref<8x32xf32, #tpu.memory_space<vmem>>, %arg5: memref<8x128xf32, #tpu.memory_space<vmem>>) attributes {dimension_semantics = [#tpu.dimension_semantics<parallel>], iteration_bounds = array<i64: 1>, scalar_prefetch = 0 : i64, scratch_operands = 1 : i64, tpu.core_type = #tpu.core_type<tc>, window_params = [{transform_indices = @transform_0, window_bounds = array<i64: 8, 100>}, {pipeline_mode = #tpu.pipeline_mode<synchronous>, transform_indices = @transform_1, window_bounds = array<i64: 128, 128>}, {pipeline_mode = #tpu.pipeline_mode<synchronous>, transform_indices = @transform_2, window_bounds = array<i64: 1, 128>}, {transform_indices = @transform_3, window_bounds = array<i64: 8, 32>}]} {
    %cst = arith.constant 0.000000e+00 : f32
    %0 = vector.broadcast %cst : f32 to vector<8x28xf32>
    %c0 = arith.constant 0 : index
    %c100 = arith.constant 100 : index
    %1 = vector.load %arg5[%c0, %c100] : memref<8x128xf32, #tpu.memory_space<vmem>>, vector<8x28xf32>
    tpu.vector_store %arg5[%c0, %c100], %0 {strides = array<i32>} : memref<8x128xf32, #tpu.memory_space<vmem>>, vector<8x28xf32>,
    %c0_0 = arith.constant 0 : index
    %c0_1 = arith.constant 0 : index
    %2 = vector.load %arg1[%c0_0, %c0_1] : memref<8x100xf32, #tpu.memory_space<vmem>>, vector<8x100xf32>
    %c0_2 = arith.constant 0 : index
    %c0_3 = arith.constant 0 : index
    %3 = vector.load %arg5[%c0_2, %c0_3] : memref<8x128xf32, #tpu.memory_space<vmem>>, vector<8x100xf32>
    tpu.vector_store %arg5[%c0_2, %c0_3], %2 {strides = array<i32>} : memref<8x128xf32, #tpu.memory_space<vmem>>, vector<8x100xf32>,
    %c0_4 = arith.constant 0 : index
    %c0_5 = arith.constant 0 : index
    %4 = vector.load %arg5[%c0_4, %c0_5] : memref<8x128xf32, #tpu.memory_space<vmem>>, vector<8x128xf32>
    %c0_6 = arith.constant 0 : index
    %c0_7 = arith.constant 0 : index
    %5 = vector.load %arg2[%c0_6, %c0_7] : memref<128x128xf32, #tpu.memory_space<vmem>>, vector<128x128xf32>
    %cst_8 = arith.constant dense<0.000000e+00> : vector<8x128xf32>
    %6 = tpu.matmul %4, %5, %cst_8 {dimension_numbers = #tpu.dot_dimension_numbers<[1], [0], [0], [1], [0, 0, 1, 1], [], []>} : vector<8x128xf32>, vector<128x128xf32>, vector<8x128xf32> -> vector<8x128xf32>
    %c0_9 = arith.constant 0 : index
    %c0_10 = arith.constant 0 : index
    %7 = vector.load %arg3[%c0_9, %c0_10] : memref<1x128xf32, #tpu.memory_space<vmem>>, vector<1x128xf32>
    %8 = vector.broadcast %7 : vector<1x128xf32> to vector<8x128xf32>
    %9 = arith.addf %6, %8 : vector<8x128xf32>
    %10 = math.tanh %9 : vector<8x128xf32>
    %11 = vector.extract_strided_slice %10 {offsets = [0, 0], sizes = [8, 32], strides = [1, 1]} : vector<8x128xf32> to vector<8x32xf32>
    %c0_11 = arith.constant 0 : index
    %c0_12 = arith.constant 0 : index
    %12 = vector.load %arg4[%c0_11, %c0_12] : memref<8x32xf32, #tpu.memory_space<vmem>>, vector<8x32xf32>
    tpu.vector_store %arg4[%c0_11, %c0_12], %11 {strides = array<i32>} : memref<8x32xf32, #tpu.memory_space<vmem>>, vector<8x32xf32>,
    return
  }
  func.func @transform_0(%arg0: i32) -> (i32, i32) {
    %c0_i32 = arith.constant 0 : i32
    %c0_i32_0 = arith.constant 0 : i32
    return %arg0, %c0_i32 : i32, i32
  }
  func.func @transform_1(%arg0: i32) -> (i32, i32) {
    %c0_i32 = arith.constant 0 : i32
    %c0_i32_0 = arith.constant 0 : i32
    %c0_i32_1 = arith.constant 0 : i32
    return %c0_i32, %c0_i32_0 : i32, i32
  }
  func.func @transform_2(%arg0: i32) -> (i32, i32) {
    %c0_i32 = arith.constant 0 : i32
    %c0_i32_0 = arith.constant 0 : i32
    %c0_i32_1 = arith.constant 0 : i32
    return %c0_i32, %c0_i32_0 : i32, i32
  }
  func.func @transform_3(%arg0: i32) -> (i32, i32) {
    %c0_i32 = arith.constant 0 : i32
    %c0_i32_0 = arith.constant 0 : i32
    return %arg0, %c0_i32 : i32, i32
  }
}

</mosaic_0001>

<llo_original>
// kernel: noode_linear_tanh.1
$region0: #{noode_linear_tanh.1}
  #allocation0 [shape = 'u32[]', space=smem, size = 0x4, offset = 0x4, fixed_abs, tag = 'smem constant byte address 0x4 - core index']
  #allocation1 [shape = 'u32[144,128]{1,0:T(1,128)}', space=vmem, size = 0x12000, scoped, tag = 'internal scratch']
  #allocation2 [shape = 'f32[8,128]{1,0:T(8,128)}', space=vmem, size = 0x1000, scoped, tag = 'scratch operand']
  %s0 = inlined_call_operand.hbm [shape: f32[8,100], index: 0, kind: input, shape index: {}]
  %s1 = inlined_call_operand.hbm [shape: f32[128,128], index: 1, kind: input, shape index: {}]
  %s2 = inlined_call_operand.vmem [shape: f32[1,128], index: 2, kind: input, shape index: {}]
  %s3 = inlined_call_operand.hbm [shape: f32[8,32], index: 3, kind: output, shape index: {}]
  %s4 = sld [smem:[#allocation0]]
  $region30: #{noode_linear_tanh.1} parent=0
    _
  %s6 = ssub.s32 1, %s4
  %s7 = scalar_select 0, %s6, %s4
  $region1: #{noode_linear_tanh.1} parent=0
    #allocation3 [shape = 'u8[4096]{0}', space=vmem, size = 0x1000, scoped, tag = 'input window, operand 0, single buffered']
    #allocation4 [shape = 's32[1]{0}', space=sflag, size = 0x4, scoped, tag = 'scoped memory for noode_linear_tanh.1']
    #allocation5 [shape = 's32[1]{0}', space=sflag, size = 0x4, scoped, tag = 'scoped memory for noode_linear_tanh.1']
    #allocation6 [shape = 'u8[65536]{0}', space=vmem, size = 0x10000, scoped, tag = 'input window, operand 1, single buffered']
    #allocation7 [shape = 's32[1]{0}', space=sflag, size = 0x4, scoped, tag = 'scoped memory for noode_linear_tanh.1']
    #allocation8 [shape = 'u8[4096]{0}', space=vmem, size = 0x1000, scoped, tag = 'output window, operand 0, single buffered']
    %8 = vsyncpa [#allocation4], 0
    %9 = vsyncpa [#allocation7], 0
    %10 = vsyncpa [#allocation5], 0
    // Predicated region
    $region2: #{noode_linear_tanh.1} parent=1 // pred_check
      _
    $region3: #{noode_linear_tanh.1} parent=1 // pred_check_branch
      %12 = sbr.rel (0) target = $region5
    $region4: #{noode_linear_tanh.1} parent=1 // pred_region
      %s14 = ssub.s32 128, 128
      %15 = vsyncadd [#allocation4], %s14
      %s17 = sshll.u32 [#allocation3], 4
      %s18 = int_to_ptr.vmem [resolvable:$true] %s17
      %20 = dma.hbm_to_vmem [thread:$0]  %s0, 128, %s18, [#allocation4]
    $region5: #{noode_linear_tanh.1} parent=1 // pred_fallthru
      _
    // Predicated region
    $region6: #{noode_linear_tanh.1} parent=1 // pred_check
      _
    $region7: #{noode_linear_tanh.1} parent=1 // pred_check_branch
      %22 = sbr.rel (0) target = $region9
    $region8: #{noode_linear_tanh.1} parent=1 // pred_region
      %s24 = ssub.s32 2048, 2048
      %25 = vsyncadd [#allocation7], %s24
      %s26 = sshll.u32 [#allocation6], 4
      %s27 = int_to_ptr.vmem [resolvable:$true] %s26
      %32 = dma.hbm_to_vmem [thread:$0]  %s1, 2048, %s27, [#allocation7], 128, 128, 8
    $region9: #{noode_linear_tanh.1} parent=1 // pred_fallthru
      _
    // Predicated region
    $region10: #{noode_linear_tanh.1} parent=1 // pred_check
      _
    $region11: #{noode_linear_tanh.1} parent=1 // pred_check_branch
      %34 = sbr.rel (0) target = $region13
    $region12: #{noode_linear_tanh.1} parent=1 // pred_region
      _
    $region13: #{noode_linear_tanh.1} parent=1 // pred_fallthru
      _
    // Predicated region
    $region14: #{noode_linear_tanh.1} parent=1 // pred_check
      _
    $region15: #{noode_linear_tanh.1} parent=1 // pred_check_branch
      %36 = sbr.rel (0) target = $region17
    $region16: #{noode_linear_tanh.1} parent=1 // pred_region
      %37 = dma.done [#allocation4], 128
    $region17: #{noode_linear_tanh.1} parent=1 // pred_fallthru
      _
    // Predicated region
    $region18: #{noode_linear_tanh.1} parent=1 // pred_check
      _
    $region19: #{noode_linear_tanh.1} parent=1 // pred_check_branch
      %39 = sbr.rel (0) target = $region21
    $region20: #{noode_linear_tanh.1} parent=1 // pred_region
      %40 = dma.done [#allocation7], 2048
    $region21: #{noode_linear_tanh.1} parent=1 // pred_fallthru
      _
    %vm41 = vcmask 1048352
    %42 = vst.msk [vmem:[#allocation2] sm:$0xff] %vm41, 0.0
    %v43 = vld [vmem:[#allocation3] sm:$0xff]
    %vm44 = vcmask 818176
    %45 = vst.msk [vmem:[#allocation2] sm:$0xff] %vm44, %v43
    %v46 = vld [vmem:[#allocation2] sm:$0xff]
    %v47 = vld [vmem:[#allocation6] sm:$0xff]
    %v48 = vld [vmem:[#allocation6 + $0x8] sm:$0xff]
    %v49 = vld [vmem:[#allocation6 + $0x10] sm:$0xff]
    %v50 = vld [vmem:[#allocation6 + $0x18] sm:$0xff]
    %v51 = vld [vmem:[#allocation6 + $0x20] sm:$0xff]
    %v52 = vld [vmem:[#allocation6 + $0x28] sm:$0xff]
    %v53 = vld [vmem:[#allocation6 + $0x30] sm:$0xff]
    %v54 = vld [vmem:[#allocation6 + $0x38] sm:$0xff]
    %v55 = vld [vmem:[#allocation6 + $0x40] sm:$0xff]
    %v56 = vld [vmem:[#allocation6 + $0x48] sm:$0xff]
    %v57 = vld [vmem:[#allocation6 + $0x50] sm:$0xff]
    %v58 = vld [vmem:[#allocation6 + $0x58] sm:$0xff]
    %v59 = vld [vmem:[#allocation6 + $0x60] sm:$0xff]
    %v60 = vld [vmem:[#allocation6 + $0x68] sm:$0xff]
    %v61 = vld [vmem:[#allocation6 + $0x70] sm:$0xff]
    %v62 = vld [vmem:[#allocation6 + $0x78] sm:$0xff]
    %v63 = vld [vmem:[%s2] sm:$0x1]
    %v65 = vlaneseq
    %v66 = vshrl.u32 %v65, 7
    %v67 = vsub.s32 0, %v66
    %v68 = vrot.slane %v63, %v67
    %70 = vmatprep.subr.mxu0 0.0
    %71 = vmatpush1.msra.mxu0 %v62
    %72 = vmatprep.subr.mxu0 0.0
    %73 = vmatpush1.msra.mxu0 %v61
    %74 = vmatprep.subr.mxu0 0.0
    %75 = vmatpush1.msra.mxu0 %v60
    %76 = vmatprep.subr.mxu0 0.0
    %77 = vmatpush1.msra.mxu0 %v59
    %78 = vmatprep.subr.mxu0 0.0
    %79 = vmatpush1.msra.mxu0 %v58
    %80 = vmatprep.subr.mxu0 0.0
    %81 = vmatpush1.msra.mxu0 %v57
    %82 = vmatprep.subr.mxu0 0.0
    %83 = vmatpush1.msra.mxu0 %v56
    %84 = vmatprep.subr.mxu0 0.0
    %85 = vmatpush1.msra.mxu0 %v55
    %86 = vmatprep.subr.mxu0 0.0
    %87 = vmatpush1.msra.mxu0 %v54
    %88 = vmatprep.subr.mxu0 0.0
    %89 = vmatpush1.msra.mxu0 %v53
    %90 = vmatprep.subr.mxu0 0.0
    %91 = vmatpush1.msra.mxu0 %v52
    %92 = vmatprep.subr.mxu0 0.0
    %93 = vmatpush1.msra.mxu0 %v51
    %94 = vmatprep.subr.mxu0 0.0
    %95 = vmatpush1.msra.mxu0 %v50
    %96 = vmatprep.subr.mxu0 0.0
    %97 = vmatpush1.msra.mxu0 %v49
    %98 = vmatprep.subr.mxu0 0.0
    %99 = vmatpush1.msra.mxu0 %v48
    %100 = vmatprep.subr.mxu0 0.0
    %101 = vmatpush1.msra.mxu0 %v47
    %102 = vmatprep.subr.mxu0 0.0
    %103 = vmatpush2.msra.mxu0 0.0
    %104 = vmatprep.subr.mxu0 0.0
    %105 = vmatpush2.msra.mxu0 0.0
    %106 = vmatprep.subr.mxu0 0.0
    %107 = vmatpush2.msra.mxu0 0.0
    %108 = vmatprep.subr.mxu0 0.0
    %109 = vmatpush2.msra.mxu0 0.0
    %110 = vmatprep.subr.mxu0 0.0
    %111 = vmatpush2.msra.mxu0 0.0
    %112 = vmatprep.subr.mxu0 0.0
    %113 = vmatpush2.msra.mxu0 0.0
    %114 = vmatprep.subr.mxu0 0.0
    %115 = vmatpush2.msra.mxu0 0.0
    %116 = vmatprep.subr.mxu0 0.0
    %117 = vmatpush2.msra.mxu0 0.0
    %118 = vmatprep.subr.mxu0 0.0
    %119 = vmatpush2.msra.mxu0 0.0
    %120 = vmatprep.subr.mxu0 0.0
    %121 = vmatpush2.msra.mxu0 0.0
    %122 = vmatprep.subr.mxu0 0.0
    %123 = vmatpush2.msra.mxu0 0.0
    %124 = vmatprep.subr.mxu0 0.0
    %125 = vmatpush2.msra.mxu0 0.0
    %126 = vmatprep.subr.mxu0 0.0
    %127 = vmatpush2.msra.mxu0 0.0
    %128 = vmatprep.subr.mxu0 0.0
    %129 = vmatpush2.msra.mxu0 0.0
    %130 = vmatprep.subr.mxu0 0.0
    %131 = vmatpush2.msra.mxu0 0.0
    %132 = vmatprep.subr.mxu0 0.0
    %133 = vmatpush2.msra.mxu0 0.0
    %134 = vmatprep.mubr.f32.mxu0 0.0
    %135 = vmatmul.mubr.f32.gmra.mxu0 %v46
    %v136 = vpop.f32.mrf.mxu0
    %v137 = vadd.f32 %v68, %v136
    %v138 = vpop.f32.mrf.mxu0
    %139 = vdwg.mxu0
    %v140 = vtanh.pop %v137
    %vm141 = vcmask 261120
    %142 = vst.msk [vmem:[#allocation8] sm:$0xff] %vm141, %v140
    // Predicated region
    $region22: #{noode_linear_tanh.1} parent=1 // pred_check
      _
    $region23: #{noode_linear_tanh.1} parent=1 // pred_check_branch
      %144 = sbr.rel (0) target = $region25
    $region24: #{noode_linear_tanh.1} parent=1 // pred_region
      %s146 = ssub.s32 128, 128
      %147 = vsyncadd [#allocation5], %s146
      %s149 = sshll.u32 [#allocation8], 4
      %s150 = int_to_ptr.vmem [resolvable:$true] %s149
      %152 = dma.vmem_to_hbm [thread:$0]  %s150, 128, %s3, [#allocation5]
    $region25: #{noode_linear_tanh.1} parent=1 // pred_fallthru
      _
    // Predicated region
    $region26: #{noode_linear_tanh.1} parent=1 // pred_check
      _
    $region27: #{noode_linear_tanh.1} parent=1 // pred_check_branch
      %154 = sbr.rel (0) target = $region29
    $region28: #{noode_linear_tanh.1} parent=1 // pred_region
      %155 = dma.done [#allocation5], 128
    $region29: #{noode_linear_tanh.1} parent=1 // pred_fallthru
      _
    %156 = vsyncpa [#allocation4], 1
    %157 = vsyncpa [#allocation7], 1
    %158 = vsyncpa [#allocation5], 1

</llo_original>
